<compile_context>
chip_gen: v7x
topology: tpu7x:2x2x1
jax: 0.10.0
libtpu: 0.0.40
codegen_flags: <defaults>
</compile_context>

<pallas_src>
import jax
import jax.numpy as jnp
from jax import lax
from jax.experimental import pallas as pl
from jax.experimental.pallas import tpu as pltpu


def addnet_kernel(data_ref, w_in_ref, b_in_ref, w2_ref, b2_ref, wi2_ref, bi2_ref,
                  gates_ref, w3_ref, b3_ref, out_ref,
                  fc1_ref, g1_ref, h1_ref, fc2_ref, g2_ref):
    T, B, inp = data_ref.shape
    hs = w2_ref.shape[0]
    TB = T * B

    # ------------- Phase 1: batched, time-independent precompute (MXU + EUP) -------------
    x_all = data_ref[...].reshape(TB, inp)                       # (T*B, inp)

    # One matmul for both cell-1 paths: [w1 | wi1]
    z1 = jnp.dot(x_all, w_in_ref[...],
                 preferred_element_type=jnp.float32) + b_in_ref[...]   # (T*B, 2*hs)
    fc1_all = z1[:, :hs]
    act1_all = jax.nn.sigmoid(z1[:, hs:])

    tr1 = gates_ref[0:1, :]
    tr2 = gates_ref[1:2, :]
    dc1 = gates_ref[2:3, :]
    dc2 = gates_ref[3:4, :]

    # Inhibit gate Heaviside(relu(act - tresh)) folded with decay:
    #   h * inhibit * decay == where(act > tresh, decay, 0) * h
    g1_all = jnp.where(act1_all > tr1, dc1, 0.0)                 # (T*B, hs)

    # Cell-2 inhibit path depends only on act1 (x-only) -> fully batched.
    act2_all = jax.nn.sigmoid(
        jnp.dot(act1_all, wi2_ref[...],
                preferred_element_type=jnp.float32) + bi2_ref[...])
    g2_all = jnp.where(act2_all > tr2, dc2, 0.0)                 # (T*B, hs)

    fc1_ref[...] = fc1_all
    g1_ref[...] = g1_all
    g2_ref[...] = g2_all

    unroll = min(T, 8)

    # ------------- Phase 2: VPU-only serial scan for h1 (store all steps) -------------
    def scan1(t, h1):
        r = pl.multiple_of(t * B, B)
        h1 = g1_ref[pl.ds(r, B), :] * h1 + fc1_ref[pl.ds(r, B), :]
        h1_ref[pl.ds(r, B), :] = h1
        return h1

    lax.fori_loop(0, T, scan1, jnp.zeros((B, hs), jnp.float32), unroll=unroll)

    # ------------- Phase 3: batched tanh + fc2 matmul over all timesteps -------------
    an1_all = jnp.tanh(h1_ref[...])                              # (T*B, hs)
    fc2_ref[...] = (jnp.dot(an1_all, w2_ref[...],
                            preferred_element_type=jnp.float32) + b2_ref[...])

    # ------------- Phase 4: VPU-only serial scan for h2 (final state only) -------------
    def scan2(t, h2):
        r = pl.multiple_of(t * B, B)
        return g2_ref[pl.ds(r, B), :] * h2 + fc2_ref[pl.ds(r, B), :]

    h2 = lax.fori_loop(0, T, scan2, jnp.zeros((B, hs), jnp.float32), unroll=unroll)

    # ------------- Phase 5: output head, last step only (out[-1]) -------------
    an2 = jnp.tanh(h2)
    out_ref[...] = (jnp.dot(an2, w3_ref[...],
                            preferred_element_type=jnp.float32) + b3_ref[...])


def pack_params(p):
    """Fuse the 15 original parameter arrays into 9 lane-dense slabs."""
    w_in = jnp.concatenate([p["w1"], p["wi1"]], axis=1)                 # (inp, 2*hs)
    b_in = jnp.concatenate([p["b1"], p["bi1"]], axis=1)                 # (1, 2*hs)
    gates = jnp.concatenate([p["tr1"], p["tr2"], p["dc1"], p["dc2"]], axis=0)  # (4, hs)
    return (w_in, b_in, p["w2"], p["b2"], p["wi2"], p["bi2"], gates, p["w3"], p["b3"])


@jax.jit
def addnet_forward(data, p):
    T, B, inp = data.shape
    hs = p["w1"].shape[1]
    out_dim = p["w3"].shape[1]
    packed = pack_params(p)

    # VMEM footprint guard: sequence + 5 per-step scratch slabs + params + output.
    # TODO(synk): switch to a T-chunked grid (BlockSpec over T, scratch carry) when
    # this assertion starts to bind (v5e 16 MiB scoped default, v7x 64 MiB physical).
    footprint = 4 * (T * B * (inp + 5 * hs)
                     + sum(int(x.size) for x in packed) + B * out_dim)
    assert footprint < 16 * 1024 * 1024, f"VMEM footprint too large: {footprint} bytes"

    def vmem():
        return pl.BlockSpec(memory_space=pltpu.MemorySpace.VMEM)

    return pl.pallas_call(
        addnet_kernel,
        out_shape=jax.ShapeDtypeStruct((B, out_dim), jnp.float32),
        in_specs=[vmem() for _ in range(1 + len(packed))],
        out_specs=vmem(),
        scratch_shapes=[
            pltpu.VMEM((T * B, hs), jnp.float32),   # fc1_all
            pltpu.VMEM((T * B, hs), jnp.float32),   # g1_all  (gate1 * decay1)
            pltpu.VMEM((T * B, hs), jnp.float32),   # h1_all
            pltpu.VMEM((T * B, hs), jnp.float32),   # fc2_all
            pltpu.VMEM((T * B, hs), jnp.float32),   # g2_all  (gate2 * decay2)
        ],
        compiler_params=pltpu.CompilerParams(vmem_limit_bytes=32 * 1024 * 1024),
    )(data, *packed)


def addnet_reference(data, p):
    """Plain-JAX reference mirroring the PyTorch forward (dropout = identity)."""
    T, B, _ = data.shape
    hs = p["w1"].shape[1]
    h1 = jnp.zeros((B, hs), jnp.float32)
    h2 = jnp.zeros((B, hs), jnp.float32)
    y = None
    for t in range(T):
        x = data[t]
        fc1 = x @ p["w1"] + p["b1"]
        act1 = jax.nn.sigmoid(x @ p["wi1"] + p["bi1"])
        inh1 = (jnp.maximum(act1 - p["tr1"], 0.0) > 0.0).astype(jnp.float32)
        h1 = h1 * inh1 * p["dc1"] + fc1
        an1 = jnp.tanh(h1)
        fc2 = an1 @ p["w2"] + p["b2"]
        act2 = jax.nn.sigmoid(act1 @ p["wi2"] + p["bi2"])
        inh2 = (jnp.maximum(act2 - p["tr2"], 0.0) > 0.0).astype(jnp.float32)
        h2 = h2 * inh2 * p["dc2"] + fc2
        an2 = jnp.tanh(h2)
        y = an2 @ p["w3"] + p["b3"]
    return y


def init_params(key, inp, hs, out):
    """Deterministic init mirroring the PyTorch __init__ distributions."""
    ks = jax.random.split(key, 12)

    def linear(kw, kb, fan_in, fan_out):
        bound = 1.0 / jnp.sqrt(fan_in)
        w = jax.random.uniform(kw, (fan_in, fan_out), jnp.float32, -bound, bound)
        b = jax.random.uniform(kb, (1, fan_out), jnp.float32, -bound, bound)
        return w, b

    w1, b1 = linear(ks[0], ks[1], inp, hs)       # fc1.lin
    wi1, bi1 = linear(ks[2], ks[3], inp, hs)     # fc1.inhibit.lin
    w2, b2 = linear(ks[4], ks[5], hs, hs)        # fc2.lin
    wi2, bi2 = linear(ks[6], ks[7], hs, hs)      # fc2.inhibit.lin
    w3, b3 = linear(ks[8], ks[9], hs, out)       # fc3

    tr1 = jnp.abs(jax.random.uniform(ks[10], (1, hs))) * 0.2 + 0.7
    tr2 = jnp.abs(jax.random.uniform(ks[11], (1, hs))) * 0.2 + 0.7
    dc1 = jnp.abs(jax.random.uniform(jax.random.fold_in(key, 100), (1, hs))) * 0.7 + 0.1
    dc2 = jnp.abs(jax.random.uniform(jax.random.fold_in(key, 101), (1, hs))) * 0.7 + 0.1

    return dict(w1=w1, b1=b1, wi1=wi1, bi1=bi1, tr1=tr1, dc1=dc1,
                w2=w2, b2=b2, wi2=wi2, bi2=bi2, tr2=tr2, dc2=dc2,
                w3=w3, b3=b3)


if __name__ == "__main__":
    # small shapes: seq=8, batch=8, input_size=32, hidden_size=32, output_size=16
    T, B, INP, HS, OUT = 8, 8, 32, 32, 16

    key = jax.random.PRNGKey(0)
    k_data, k_params = jax.random.split(key)
    data = jax.random.normal(k_data, (T, B, INP), jnp.float32)
    params = init_params(k_params, INP, HS, OUT)

    y_kernel = jax.block_until_ready(addnet_forward(data, params))
    y_ref = jax.block_until_ready(addnet_reference(data, params))

    assert y_kernel.shape == (B, OUT)
    assert jnp.allclose(y_kernel, y_ref, atol=2e-5, rtol=2e-5), (
        float(jnp.max(jnp.abs(y_kernel - y_ref))))
    print("KERNEL_OK")
</pallas_src>

<mosaic_0001>
module attributes {stable_mosaic.version = 11 : i64} {
  func.func @addnet_kernel(%arg0: memref<8x8x32xf32, #tpu.memory_space<vmem>>, %arg1: memref<32x64xf32, #tpu.memory_space<vmem>>, %arg2: memref<1x64xf32, #tpu.memory_space<vmem>>, %arg3: memref<32x32xf32, #tpu.memory_space<vmem>>, %arg4: memref<1x32xf32, #tpu.memory_space<vmem>>, %arg5: memref<32x32xf32, #tpu.memory_space<vmem>>, %arg6: memref<1x32xf32, #tpu.memory_space<vmem>>, %arg7: memref<4x32xf32, #tpu.memory_space<vmem>>, %arg8: memref<32x16xf32, #tpu.memory_space<vmem>>, %arg9: memref<1x16xf32, #tpu.memory_space<vmem>>, %arg10: memref<8x16xf32, #tpu.memory_space<vmem>>, %arg11: memref<64x32xf32, #tpu.memory_space<vmem>>, %arg12: memref<64x32xf32, #tpu.memory_space<vmem>>, %arg13: memref<64x32xf32, #tpu.memory_space<vmem>>, %arg14: memref<64x32xf32, #tpu.memory_space<vmem>>, %arg15: memref<64x32xf32, #tpu.memory_space<vmem>>) attributes {dimension_semantics = [], scalar_prefetch = 0 : i64, scratch_operands = 5 : i64, tpu.core_type = #tpu.core_type<tc>} {
    %c0 = arith.constant 0 : index
    %c0_0 = arith.constant 0 : index
    %c0_1 = arith.constant 0 : index
    %0 = vector.load %arg0[%c0, %c0_0, %c0_1] : memref<8x8x32xf32, #tpu.memory_space<vmem>>, vector<8x8x32xf32>
    %1 = vector.shape_cast %0 : vector<8x8x32xf32> to vector<64x32xf32>
    %c0_2 = arith.constant 0 : index
    %c0_3 = arith.constant 0 : index
    %2 = vector.load %arg1[%c0_2, %c0_3] : memref<32x64xf32, #tpu.memory_space<vmem>>, vector<32x64xf32>
    %cst = arith.constant dense<0.000000e+00> : vector<64x64xf32>
    %3 = tpu.matmul %1, %2, %cst {dimension_numbers = #tpu.dot_dimension_numbers<[1], [0], [0], [1], [0, 0, 1, 1], [], []>} : vector<64x32xf32>, vector<32x64xf32>, vector<64x64xf32> -> vector<64x64xf32>
    %c0_4 = arith.constant 0 : index
    %c0_5 = arith.constant 0 : index
    %4 = vector.load %arg2[%c0_4, %c0_5] : memref<1x64xf32, #tpu.memory_space<vmem>>, vector<1x64xf32>
    %5 = vector.broadcast %4 : vector<1x64xf32> to vector<64x64xf32>
    %6 = arith.addf %3, %5 : vector<64x64xf32>
    %7 = vector.extract_strided_slice %6 {offsets = [0, 0], sizes = [64, 32], strides = [1, 1]} : vector<64x64xf32> to vector<64x32xf32>
    %8 = vector.extract_strided_slice %6 {offsets = [0, 32], sizes = [64, 32], strides = [1, 1]} : vector<64x64xf32> to vector<64x32xf32>
    %9 = arith.negf %8 : vector<64x32xf32>
    %10 = math.exp %9 : vector<64x32xf32>
    %cst_6 = arith.constant 1.000000e+00 : f32
    %11 = vector.broadcast %cst_6 : f32 to vector<64x32xf32>
    %12 = arith.addf %11, %10 : vector<64x32xf32>
    %13 = arith.divf %11, %12 : vector<64x32xf32>
    %c0_7 = arith.constant 0 : index
    %c0_8 = arith.constant 0 : index
    %14 = vector.load %arg7[%c0_7, %c0_8] : memref<4x32xf32, #tpu.memory_space<vmem>>, vector<1x32xf32>
    %c1 = arith.constant 1 : index
    %c0_9 = arith.constant 0 : index
    %15 = vector.load %arg7[%c1, %c0_9] : memref<4x32xf32, #tpu.memory_space<vmem>>, vector<1x32xf32>
    %c2 = arith.constant 2 : index
    %c0_10 = arith.constant 0 : index
    %16 = vector.load %arg7[%c2, %c0_10] : memref<4x32xf32, #tpu.memory_space<vmem>>, vector<1x32xf32>
    %c3 = arith.constant 3 : index
    %c0_11 = arith.constant 0 : index
    %17 = vector.load %arg7[%c3, %c0_11] : memref<4x32xf32, #tpu.memory_space<vmem>>, vector<1x32xf32>
    %18 = vector.broadcast %14 : vector<1x32xf32> to vector<64x32xf32>
    %19 = arith.cmpf ogt, %13, %18 : vector<64x32xf32>
    %cst_12 = arith.constant 0.000000e+00 : f32
    %20 = vector.shape_cast %16 : vector<1x32xf32> to vector<1x32xf32>
    %21 = vector.broadcast %20 : vector<1x32xf32> to vector<64x32xf32>
    %22 = vector.broadcast %cst_12 : f32 to vector<64x32xf32>
    %23 = arith.select %19, %21, %22 : vector<64x32xi1>, vector<64x32xf32>
    %c0_13 = arith.constant 0 : index
    %c0_14 = arith.constant 0 : index
    %24 = vector.load %arg5[%c0_13, %c0_14] : memref<32x32xf32, #tpu.memory_space<vmem>>, vector<32x32xf32>
    %cst_15 = arith.constant dense<0.000000e+00> : vector<64x32xf32>
    %25 = tpu.matmul %13, %24, %cst_15 {dimension_numbers = #tpu.dot_dimension_numbers<[1], [0], [0], [1], [0, 0, 1, 1], [], []>} : vector<64x32xf32>, vector<32x32xf32>, vector<64x32xf32> -> vector<64x32xf32>
    %c0_16 = arith.constant 0 : index
    %c0_17 = arith.constant 0 : index
    %26 = vector.load %arg6[%c0_16, %c0_17] : memref<1x32xf32, #tpu.memory_space<vmem>>, vector<1x32xf32>
    %27 = vector.broadcast %26 : vector<1x32xf32> to vector<64x32xf32>
    %28 = arith.addf %25, %27 : vector<64x32xf32>
    %29 = arith.negf %28 : vector<64x32xf32>
    %30 = math.exp %29 : vector<64x32xf32>
    %cst_18 = arith.constant 1.000000e+00 : f32
    %31 = vector.broadcast %cst_18 : f32 to vector<64x32xf32>
    %32 = arith.addf %31, %30 : vector<64x32xf32>
    %33 = arith.divf %31, %32 : vector<64x32xf32>
    %34 = vector.broadcast %15 : vector<1x32xf32> to vector<64x32xf32>
    %35 = arith.cmpf ogt, %33, %34 : vector<64x32xf32>
    %cst_19 = arith.constant 0.000000e+00 : f32
    %36 = vector.shape_cast %17 : vector<1x32xf32> to vector<1x32xf32>
    %37 = vector.broadcast %36 : vector<1x32xf32> to vector<64x32xf32>
    %38 = vector.broadcast %cst_19 : f32 to vector<64x32xf32>
    %39 = arith.select %35, %37, %38 : vector<64x32xi1>, vector<64x32xf32>
    %c0_20 = arith.constant 0 : index
    %c0_21 = arith.constant 0 : index
    %40 = vector.load %arg11[%c0_20, %c0_21] : memref<64x32xf32, #tpu.memory_space<vmem>>, vector<64x32xf32>
    tpu.vector_store %arg11[%c0_20, %c0_21], %7 {strides = array<i32>} : memref<64x32xf32, #tpu.memory_space<vmem>>, vector<64x32xf32>,
    %c0_22 = arith.constant 0 : index
    %c0_23 = arith.constant 0 : index
    %41 = vector.load %arg12[%c0_22, %c0_23] : memref<64x32xf32, #tpu.memory_space<vmem>>, vector<64x32xf32>
    tpu.vector_store %arg12[%c0_22, %c0_23], %23 {strides = array<i32>} : memref<64x32xf32, #tpu.memory_space<vmem>>, vector<64x32xf32>,
    %c0_24 = arith.constant 0 : index
    %c0_25 = arith.constant 0 : index
    %42 = vector.load %arg15[%c0_24, %c0_25] : memref<64x32xf32, #tpu.memory_space<vmem>>, vector<64x32xf32>
    tpu.vector_store %arg15[%c0_24, %c0_25], %39 {strides = array<i32>} : memref<64x32xf32, #tpu.memory_space<vmem>>, vector<64x32xf32>,
    %cst_26 = arith.constant 0.000000e+00 : f32
    %43 = vector.broadcast %cst_26 : f32 to vector<8x32xf32>
    %c0_i32 = arith.constant 0 : i32
    %c8_i32 = arith.constant 8 : i32
    %44 = arith.muli %c0_i32, %c8_i32 : i32
    %45 = tpu.assume_multiple %44, 8 : i32
    %46 = arith.index_cast %45 : i32 to index
    %c0_27 = arith.constant 0 : index
    %47 = vector.load %arg12[%46, %c0_27] : memref<64x32xf32, #tpu.memory_space<vmem>>, vector<8x32xf32>
    %48 = arith.mulf %47, %43 : vector<8x32xf32>
    %49 = arith.index_cast %45 : i32 to index
    %c0_28 = arith.constant 0 : index
    %50 = vector.load %arg11[%49, %c0_28] : memref<64x32xf32, #tpu.memory_space<vmem>>, vector<8x32xf32>
    %51 = arith.addf %48, %50 : vector<8x32xf32>
    %52 = arith.index_cast %45 : i32 to index
    %c0_29 = arith.constant 0 : index
    %53 = vector.load %arg13[%52, %c0_29] : memref<64x32xf32, #tpu.memory_space<vmem>>, vector<8x32xf32>
    tpu.vector_store %arg13[%52, %c0_29], %51 {strides = array<i32>} : memref<64x32xf32, #tpu.memory_space<vmem>>, vector<8x32xf32>,
    %c1_i32 = arith.constant 1 : i32
    %c8_i32_30 = arith.constant 8 : i32
    %54 = arith.muli %c1_i32, %c8_i32_30 : i32
    %55 = tpu.assume_multiple %54, 8 : i32
    %56 = arith.index_cast %55 : i32 to index
    %c0_31 = arith.constant 0 : index
    %57 = vector.load %arg12[%56, %c0_31] : memref<64x32xf32, #tpu.memory_space<vmem>>, vector<8x32xf32>
    %58 = arith.mulf %57, %51 : vector<8x32xf32>
    %59 = arith.index_cast %55 : i32 to index
    %c0_32 = arith.constant 0 : index
    %60 = vector.load %arg11[%59, %c0_32] : memref<64x32xf32, #tpu.memory_space<vmem>>, vector<8x32xf32>
    %61 = arith.addf %58, %60 : vector<8x32xf32>
    %62 = arith.index_cast %55 : i32 to index
    %c0_33 = arith.constant 0 : index
    %63 = vector.load %arg13[%62, %c0_33] : memref<64x32xf32, #tpu.memory_space<vmem>>, vector<8x32xf32>
    tpu.vector_store %arg13[%62, %c0_33], %61 {strides = array<i32>} : memref<64x32xf32, #tpu.memory_space<vmem>>, vector<8x32xf32>,
    %c2_i32 = arith.constant 2 : i32
    %c8_i32_34 = arith.constant 8 : i32
    %64 = arith.muli %c2_i32, %c8_i32_34 : i32
    %65 = tpu.assume_multiple %64, 8 : i32
    %66 = arith.index_cast %65 : i32 to index
    %c0_35 = arith.constant 0 : index
    %67 = vector.load %arg12[%66, %c0_35] : memref<64x32xf32, #tpu.memory_space<vmem>>, vector<8x32xf32>
    %68 = arith.mulf %67, %61 : vector<8x32xf32>
    %69 = arith.index_cast %65 : i32 to index
    %c0_36 = arith.constant 0 : index
    %70 = vector.load %arg11[%69, %c0_36] : memref<64x32xf32, #tpu.memory_space<vmem>>, vector<8x32xf32>
    %71 = arith.addf %68, %70 : vector<8x32xf32>
    %72 = arith.index_cast %65 : i32 to index
    %c0_37 = arith.constant 0 : index
    %73 = vector.load %arg13[%72, %c0_37] : memref<64x32xf32, #tpu.memory_space<vmem>>, vector<8x32xf32>
    tpu.vector_store %arg13[%72, %c0_37], %71 {strides = array<i32>} : memref<64x32xf32, #tpu.memory_space<vmem>>, vector<8x32xf32>,
    %c3_i32 = arith.constant 3 : i32
    %c8_i32_38 = arith.constant 8 : i32
    %74 = arith.muli %c3_i32, %c8_i32_38 : i32
    %75 = tpu.assume_multiple %74, 8 : i32
    %76 = arith.index_cast %75 : i32 to index
    %c0_39 = arith.constant 0 : index
    %77 = vector.load %arg12[%76, %c0_39] : memref<64x32xf32, #tpu.memory_space<vmem>>, vector<8x32xf32>
    %78 = arith.mulf %77, %71 : vector<8x32xf32>
    %79 = arith.index_cast %75 : i32 to index
    %c0_40 = arith.constant 0 : index
    %80 = vector.load %arg11[%79, %c0_40] : memref<64x32xf32, #tpu.memory_space<vmem>>, vector<8x32xf32>
    %81 = arith.addf %78, %80 : vector<8x32xf32>
    %82 = arith.index_cast %75 : i32 to index
    %c0_41 = arith.constant 0 : index
    %83 = vector.load %arg13[%82, %c0_41] : memref<64x32xf32, #tpu.memory_space<vmem>>, vector<8x32xf32>
    tpu.vector_store %arg13[%82, %c0_41], %81 {strides = array<i32>} : memref<64x32xf32, #tpu.memory_space<vmem>>, vector<8x32xf32>,
    %c4_i32 = arith.constant 4 : i32
    %c8_i32_42 = arith.constant 8 : i32
    %84 = arith.muli %c4_i32, %c8_i32_42 : i32
    %85 = tpu.assume_multiple %84, 8 : i32
    %86 = arith.index_cast %85 : i32 to index
    %c0_43 = arith.constant 0 : index
    %87 = vector.load %arg12[%86, %c0_43] : memref<64x32xf32, #tpu.memory_space<vmem>>, vector<8x32xf32>
    %88 = arith.mulf %87, %81 : vector<8x32xf32>
    %89 = arith.index_cast %85 : i32 to index
    %c0_44 = arith.constant 0 : index
    %90 = vector.load %arg11[%89, %c0_44] : memref<64x32xf32, #tpu.memory_space<vmem>>, vector<8x32xf32>
    %91 = arith.addf %88, %90 : vector<8x32xf32>
    %92 = arith.index_cast %85 : i32 to index
    %c0_45 = arith.constant 0 : index
    %93 = vector.load %arg13[%92, %c0_45] : memref<64x32xf32, #tpu.memory_space<vmem>>, vector<8x32xf32>
    tpu.vector_store %arg13[%92, %c0_45], %91 {strides = array<i32>} : memref<64x32xf32, #tpu.memory_space<vmem>>, vector<8x32xf32>,
    %c5_i32 = arith.constant 5 : i32
    %c8_i32_46 = arith.constant 8 : i32
    %94 = arith.muli %c5_i32, %c8_i32_46 : i32
    %95 = tpu.assume_multiple %94, 8 : i32
    %96 = arith.index_cast %95 : i32 to index
    %c0_47 = arith.constant 0 : index
    %97 = vector.load %arg12[%96, %c0_47] : memref<64x32xf32, #tpu.memory_space<vmem>>, vector<8x32xf32>
    %98 = arith.mulf %97, %91 : vector<8x32xf32>
    %99 = arith.index_cast %95 : i32 to index
    %c0_48 = arith.constant 0 : index
    %100 = vector.load %arg11[%99, %c0_48] : memref<64x32xf32, #tpu.memory_space<vmem>>, vector<8x32xf32>
    %101 = arith.addf %98, %100 : vector<8x32xf32>
    %102 = arith.index_cast %95 : i32 to index
    %c0_49 = arith.constant 0 : index
    %103 = vector.load %arg13[%102, %c0_49] : memref<64x32xf32, #tpu.memory_space<vmem>>, vector<8x32xf32>
    tpu.vector_store %arg13[%102, %c0_49], %101 {strides = array<i32>} : memref<64x32xf32, #tpu.memory_space<vmem>>, vector<8x32xf32>,
    %c6_i32 = arith.constant 6 : i32
    %c8_i32_50 = arith.constant 8 : i32
    %104 = arith.muli %c6_i32, %c8_i32_50 : i32
    %105 = tpu.assume_multiple %104, 8 : i32
    %106 = arith.index_cast %105 : i32 to index
    %c0_51 = arith.constant 0 : index
    %107 = vector.load %arg12[%106, %c0_51] : memref<64x32xf32, #tpu.memory_space<vmem>>, vector<8x32xf32>
    %108 = arith.mulf %107, %101 : vector<8x32xf32>
    %109 = arith.index_cast %105 : i32 to index
    %c0_52 = arith.constant 0 : index
    %110 = vector.load %arg11[%109, %c0_52] : memref<64x32xf32, #tpu.memory_space<vmem>>, vector<8x32xf32>
    %111 = arith.addf %108, %110 : vector<8x32xf32>
    %112 = arith.index_cast %105 : i32 to index
    %c0_53 = arith.constant 0 : index
    %113 = vector.load %arg13[%112, %c0_53] : memref<64x32xf32, #tpu.memory_space<vmem>>, vector<8x32xf32>
    tpu.vector_store %arg13[%112, %c0_53], %111 {strides = array<i32>} : memref<64x32xf32, #tpu.memory_space<vmem>>, vector<8x32xf32>,
    %c7_i32 = arith.constant 7 : i32
    %c8_i32_54 = arith.constant 8 : i32
    %114 = arith.muli %c7_i32, %c8_i32_54 : i32
    %115 = tpu.assume_multiple %114, 8 : i32
    %116 = arith.index_cast %115 : i32 to index
    %c0_55 = arith.constant 0 : index
    %117 = vector.load %arg12[%116, %c0_55] : memref<64x32xf32, #tpu.memory_space<vmem>>, vector<8x32xf32>
    %118 = arith.mulf %117, %111 : vector<8x32xf32>
    %119 = arith.index_cast %115 : i32 to index
    %c0_56 = arith.constant 0 : index
    %120 = vector.load %arg11[%119, %c0_56] : memref<64x32xf32, #tpu.memory_space<vmem>>, vector<8x32xf32>
    %121 = arith.addf %118, %120 : vector<8x32xf32>
    %122 = arith.index_cast %115 : i32 to index
    %c0_57 = arith.constant 0 : index
    %123 = vector.load %arg13[%122, %c0_57] : memref<64x32xf32, #tpu.memory_space<vmem>>, vector<8x32xf32>
    tpu.vector_store %arg13[%122, %c0_57], %121 {strides = array<i32>} : memref<64x32xf32, #tpu.memory_space<vmem>>, vector<8x32xf32>,
    %c8_i32_58 = arith.constant 8 : i32
    %c0_59 = arith.constant 0 : index
    %c0_60 = arith.constant 0 : index
    %124 = vector.load %arg13[%c0_59, %c0_60] : memref<64x32xf32, #tpu.memory_space<vmem>>, vector<64x32xf32>
    %125 = math.tanh %124 : vector<64x32xf32>
    %c0_61 = arith.constant 0 : index
    %c0_62 = arith.constant 0 : index
    %126 = vector.load %arg3[%c0_61, %c0_62] : memref<32x32xf32, #tpu.memory_space<vmem>>, vector<32x32xf32>
    %cst_63 = arith.constant dense<0.000000e+00> : vector<64x32xf32>
    %127 = tpu.matmul %125, %126, %cst_63 {dimension_numbers = #tpu.dot_dimension_numbers<[1], [0], [0], [1], [0, 0, 1, 1], [], []>} : vector<64x32xf32>, vector<32x32xf32>, vector<64x32xf32> -> vector<64x32xf32>
    %c0_64 = arith.constant 0 : index
    %c0_65 = arith.constant 0 : index
    %128 = vector.load %arg4[%c0_64, %c0_65] : memref<1x32xf32, #tpu.memory_space<vmem>>, vector<1x32xf32>
    %129 = vector.broadcast %128 : vector<1x32xf32> to vector<64x32xf32>
    %130 = arith.addf %127, %129 : vector<64x32xf32>
    %c0_66 = arith.constant 0 : index
    %c0_67 = arith.constant 0 : index
    %131 = vector.load %arg14[%c0_66, %c0_67] : memref<64x32xf32, #tpu.memory_space<vmem>>, vector<64x32xf32>
    tpu.vector_store %arg14[%c0_66, %c0_67], %130 {strides = array<i32>} : memref<64x32xf32, #tpu.memory_space<vmem>>, vector<64x32xf32>,
    %cst_68 = arith.constant 0.000000e+00 : f32
    %132 = vector.broadcast %cst_68 : f32 to vector<8x32xf32>
    %c0_i32_69 = arith.constant 0 : i32
    %c8_i32_70 = arith.constant 8 : i32
    %133 = arith.muli %c0_i32_69, %c8_i32_70 : i32
    %134 = tpu.assume_multiple %133, 8 : i32
    %135 = arith.index_cast %134 : i32 to index
    %c0_71 = arith.constant 0 : index
    %136 = vector.load %arg15[%135, %c0_71] : memref<64x32xf32, #tpu.memory_space<vmem>>, vector<8x32xf32>
    %137 = arith.mulf %136, %132 : vector<8x32xf32>
    %138 = arith.index_cast %134 : i32 to index
    %c0_72 = arith.constant 0 : index
    %139 = vector.load %arg14[%138, %c0_72] : memref<64x32xf32, #tpu.memory_space<vmem>>, vector<8x32xf32>
    %140 = arith.addf %137, %139 : vector<8x32xf32>
    %c1_i32_73 = arith.constant 1 : i32
    %c8_i32_74 = arith.constant 8 : i32
    %141 = arith.muli %c1_i32_73, %c8_i32_74 : i32
    %142 = tpu.assume_multiple %141, 8 : i32
    %143 = arith.index_cast %142 : i32 to index
    %c0_75 = arith.constant 0 : index
    %144 = vector.load %arg15[%143, %c0_75] : memref<64x32xf32, #tpu.memory_space<vmem>>, vector<8x32xf32>
    %145 = arith.mulf %144, %140 : vector<8x32xf32>
    %146 = arith.index_cast %142 : i32 to index
    %c0_76 = arith.constant 0 : index
    %147 = vector.load %arg14[%146, %c0_76] : memref<64x32xf32, #tpu.memory_space<vmem>>, vector<8x32xf32>
    %148 = arith.addf %145, %147 : vector<8x32xf32>
    %c2_i32_77 = arith.constant 2 : i32
    %c8_i32_78 = arith.constant 8 : i32
    %149 = arith.muli %c2_i32_77, %c8_i32_78 : i32
    %150 = tpu.assume_multiple %149, 8 : i32
    %151 = arith.index_cast %150 : i32 to index
    %c0_79 = arith.constant 0 : index
    %152 = vector.load %arg15[%151, %c0_79] : memref<64x32xf32, #tpu.memory_space<vmem>>, vector<8x32xf32>
    %153 = arith.mulf %152, %148 : vector<8x32xf32>
    %154 = arith.index_cast %150 : i32 to index
    %c0_80 = arith.constant 0 : index
    %155 = vector.load %arg14[%154, %c0_80] : memref<64x32xf32, #tpu.memory_space<vmem>>, vector<8x32xf32>
    %156 = arith.addf %153, %155 : vector<8x32xf32>
    %c3_i32_81 = arith.constant 3 : i32
    %c8_i32_82 = arith.constant 8 : i32
    %157 = arith.muli %c3_i32_81, %c8_i32_82 : i32
    %158 = tpu.assume_multiple %157, 8 : i32
    %159 = arith.index_cast %158 : i32 to index
    %c0_83 = arith.constant 0 : index
    %160 = vector.load %arg15[%159, %c0_83] : memref<64x32xf32, #tpu.memory_space<vmem>>, vector<8x32xf32>
    %161 = arith.mulf %160, %156 : vector<8x32xf32>
    %162 = arith.index_cast %158 : i32 to index
    %c0_84 = arith.constant 0 : index
    %163 = vector.load %arg14[%162, %c0_84] : memref<64x32xf32, #tpu.memory_space<vmem>>, vector<8x32xf32>
    %164 = arith.addf %161, %163 : vector<8x32xf32>
    %c4_i32_85 = arith.constant 4 : i32
    %c8_i32_86 = arith.constant 8 : i32
    %165 = arith.muli %c4_i32_85, %c8_i32_86 : i32
    %166 = tpu.assume_multiple %165, 8 : i32
    %167 = arith.index_cast %166 : i32 to index
    %c0_87 = arith.constant 0 : index
    %168 = vector.load %arg15[%167, %c0_87] : memref<64x32xf32, #tpu.memory_space<vmem>>, vector<8x32xf32>
    %169 = arith.mulf %168, %164 : vector<8x32xf32>
    %170 = arith.index_cast %166 : i32 to index
    %c0_88 = arith.constant 0 : index
    %171 = vector.load %arg14[%170, %c0_88] : memref<64x32xf32, #tpu.memory_space<vmem>>, vector<8x32xf32>
    %172 = arith.addf %169, %171 : vector<8x32xf32>
    %c5_i32_89 = arith.constant 5 : i32
    %c8_i32_90 = arith.constant 8 : i32
    %173 = arith.muli %c5_i32_89, %c8_i32_90 : i32
    %174 = tpu.assume_multiple %173, 8 : i32
    %175 = arith.index_cast %174 : i32 to index
    %c0_91 = arith.constant 0 : index
    %176 = vector.load %arg15[%175, %c0_91] : memref<64x32xf32, #tpu.memory_space<vmem>>, vector<8x32xf32>
    %177 = arith.mulf %176, %172 : vector<8x32xf32>
    %178 = arith.index_cast %174 : i32 to index
    %c0_92 = arith.constant 0 : index
    %179 = vector.load %arg14[%178, %c0_92] : memref<64x32xf32, #tpu.memory_space<vmem>>, vector<8x32xf32>
    %180 = arith.addf %177, %179 : vector<8x32xf32>
    %c6_i32_93 = arith.constant 6 : i32
    %c8_i32_94 = arith.constant 8 : i32
    %181 = arith.muli %c6_i32_93, %c8_i32_94 : i32
    %182 = tpu.assume_multiple %181, 8 : i32
    %183 = arith.index_cast %182 : i32 to index
    %c0_95 = arith.constant 0 : index
    %184 = vector.load %arg15[%183, %c0_95] : memref<64x32xf32, #tpu.memory_space<vmem>>, vector<8x32xf32>
    %185 = arith.mulf %184, %180 : vector<8x32xf32>
    %186 = arith.index_cast %182 : i32 to index
    %c0_96 = arith.constant 0 : index
    %187 = vector.load %arg14[%186, %c0_96] : memref<64x32xf32, #tpu.memory_space<vmem>>, vector<8x32xf32>
    %188 = arith.addf %185, %187 : vector<8x32xf32>
    %c7_i32_97 = arith.constant 7 : i32
    %c8_i32_98 = arith.constant 8 : i32
    %189 = arith.muli %c7_i32_97, %c8_i32_98 : i32
    %190 = tpu.assume_multiple %189, 8 : i32
    %191 = arith.index_cast %190 : i32 to index
    %c0_99 = arith.constant 0 : index
    %192 = vector.load %arg15[%191, %c0_99] : memref<64x32xf32, #tpu.memory_space<vmem>>, vector<8x32xf32>
    %193 = arith.mulf %192, %188 : vector<8x32xf32>
    %194 = arith.index_cast %190 : i32 to index
    %c0_100 = arith.constant 0 : index
    %195 = vector.load %arg14[%194, %c0_100] : memref<64x32xf32, #tpu.memory_space<vmem>>, vector<8x32xf32>
    %196 = arith.addf %193, %195 : vector<8x32xf32>
    %c8_i32_101 = arith.constant 8 : i32
    %197 = math.tanh %196 : vector<8x32xf32>
    %c0_102 = arith.constant 0 : index
    %c0_103 = arith.constant 0 : index
    %198 = vector.load %arg8[%c0_102, %c0_103] : memref<32x16xf32, #tpu.memory_space<vmem>>, vector<32x16xf32>
    %cst_104 = arith.constant dense<0.000000e+00> : vector<8x16xf32>
    %199 = tpu.matmul %197, %198, %cst_104 {dimension_numbers = #tpu.dot_dimension_numbers<[1], [0], [0], [1], [0, 0, 1, 1], [], []>} : vector<8x32xf32>, vector<32x16xf32>, vector<8x16xf32> -> vector<8x16xf32>
    %c0_105 = arith.constant 0 : index
    %c0_106 = arith.constant 0 : index
    %200 = vector.load %arg9[%c0_105, %c0_106] : memref<1x16xf32, #tpu.memory_space<vmem>>, vector<1x16xf32>
    %201 = vector.broadcast %200 : vector<1x16xf32> to vector<8x16xf32>
    %202 = arith.addf %199, %201 : vector<8x16xf32>
    %c0_107 = arith.constant 0 : index
    %c0_108 = arith.constant 0 : index
    %203 = vector.load %arg10[%c0_107, %c0_108] : memref<8x16xf32, #tpu.memory_space<vmem>>, vector<8x16xf32>
    tpu.vector_store %arg10[%c0_107, %c0_108], %202 {strides = array<i32>} : memref<8x16xf32, #tpu.memory_space<vmem>>, vector<8x16xf32>,
    return
  }
}

</mosaic_0001>

<llo_original>
// kernel: addnet_forward.1
$region0: #{addnet_forward.1}
  #allocation0 [shape = 'u32[]', space=smem, size = 0x4, offset = 0x4, fixed_abs, tag = 'smem constant byte address 0x4 - core index']
  #allocation1 [shape = 'u32[144,128]{1,0:T(1,128)}', space=vmem, size = 0x12000, scoped, tag = 'internal scratch']
  #allocation2 [shape = 'f32[64,32]{1,0:T(8,128)}', space=vmem, size = 0x8000, scoped, tag = 'scratch operand']
  #allocation3 [shape = 'f32[64,32]{1,0:T(8,128)}', space=vmem, size = 0x8000, scoped, tag = 'scratch operand']
  #allocation4 [shape = 'f32[64,32]{1,0:T(8,128)}', space=vmem, size = 0x8000, scoped, tag = 'scratch operand']
  #allocation5 [shape = 'f32[64,32]{1,0:T(8,128)}', space=vmem, size = 0x8000, scoped, tag = 'scratch operand']
  #allocation6 [shape = 'f32[64,32]{1,0:T(8,128)}', space=vmem, size = 0x8000, scoped, tag = 'scratch operand']
  %s0 = inlined_call_operand.vmem [shape: f32[8,8,32], index: 0, kind: input, shape index: {}]
  %s1 = inlined_call_operand.vmem [shape: f32[32,64], index: 1, kind: input, shape index: {}]
  %s2 = inlined_call_operand.vmem [shape: f32[1,64], index: 2, kind: input, shape index: {}]
  %s3 = inlined_call_operand.vmem [shape: f32[32,32], index: 3, kind: input, shape index: {}]
  %s4 = inlined_call_operand.vmem [shape: f32[1,32], index: 4, kind: input, shape index: {}]
  %s5 = inlined_call_operand.vmem [shape: f32[32,32], index: 5, kind: input, shape index: {}]
  %s6 = inlined_call_operand.vmem [shape: f32[1,32], index: 6, kind: input, shape index: {}]
  %s7 = inlined_call_operand.vmem [shape: f32[4,32], index: 7, kind: input, shape index: {}]
  %s8 = inlined_call_operand.vmem [shape: f32[32,16], index: 8, kind: input, shape index: {}]
  %s9 = inlined_call_operand.vmem [shape: f32[1,16], index: 9, kind: input, shape index: {}]
  %s10 = inlined_call_operand.hbm [shape: f32[8,16], index: 10, kind: output, shape index: {}]
  %s11 = sld [smem:[#allocation0]]
  $region50: #{addnet_forward.1} parent=0
    _
  %s13 = ssub.s32 1, %s11
  %s14 = scalar_select 0, %s13, %s11
  $region1: #{addnet_forward.1} parent=0
    #allocation7 [shape = 'u8[4096]{0}', space=vmem, size = 0x1000, scoped, tag = 'output window, operand 0, single buffered']
    #allocation8 [shape = 's32[1]{0}', space=sflag, size = 0x4, scoped, tag = 'scoped memory for addnet_forward.1']
    %15 = vsyncpa [#allocation8], 0
    // Predicated region
    $region2: #{addnet_forward.1} parent=1 // pred_check
      _
    $region3: #{addnet_forward.1} parent=1 // pred_check_branch
      %17 = sbr.rel (0) target = $region5
    $region4: #{addnet_forward.1} parent=1 // pred_region
      _
    $region5: #{addnet_forward.1} parent=1 // pred_fallthru
      _
    // Predicated region
    $region6: #{addnet_forward.1} parent=1 // pred_check
      _
    $region7: #{addnet_forward.1} parent=1 // pred_check_branch
      %19 = sbr.rel (0) target = $region9
    $region8: #{addnet_forward.1} parent=1 // pred_region
      _
    $region9: #{addnet_forward.1} parent=1 // pred_fallthru
      _
    // Predicated region
    $region10: #{addnet_forward.1} parent=1 // pred_check
      _
    $region11: #{addnet_forward.1} parent=1 // pred_check_branch
      %21 = sbr.rel (0) target = $region13
    $region12: #{addnet_forward.1} parent=1 // pred_region
      _
    $region13: #{addnet_forward.1} parent=1 // pred_fallthru
      _
    // Predicated region
    $region14: #{addnet_forward.1} parent=1 // pred_check
      _
    $region15: #{addnet_forward.1} parent=1 // pred_check_branch
      %23 = sbr.rel (0) target = $region17
    $region16: #{addnet_forward.1} parent=1 // pred_region
      _
    $region17: #{addnet_forward.1} parent=1 // pred_fallthru
      _
    // Predicated region
    $region18: #{addnet_forward.1} parent=1 // pred_check
      _
    $region19: #{addnet_forward.1} parent=1 // pred_check_branch
      %25 = sbr.rel (0) target = $region21
    $region20: #{addnet_forward.1} parent=1 // pred_region
      _
    $region21: #{addnet_forward.1} parent=1 // pred_fallthru
      _
    // Predicated region
    $region22: #{addnet_forward.1} parent=1 // pred_check
      _
    $region23: #{addnet_forward.1} parent=1 // pred_check_branch
      %27 = sbr.rel (0) target = $region25
    $region24: #{addnet_forward.1} parent=1 // pred_region
      _
    $region25: #{addnet_forward.1} parent=1 // pred_fallthru
      _
    // Predicated region
    $region26: #{addnet_forward.1} parent=1 // pred_check
      _
    $region27: #{addnet_forward.1} parent=1 // pred_check_branch
      %29 = sbr.rel (0) target = $region29
    $region28: #{addnet_forward.1} parent=1 // pred_region
      _
    $region29: #{addnet_forward.1} parent=1 // pred_fallthru
      _
    // Predicated region
    $region30: #{addnet_forward.1} parent=1 // pred_check
      _
    $region31: #{addnet_forward.1} parent=1 // pred_check_branch
      %31 = sbr.rel (0) target = $region33
    $region32: #{addnet_forward.1} parent=1 // pred_region
      _
    $region33: #{addnet_forward.1} parent=1 // pred_fallthru
      _
    // Predicated region
    $region34: #{addnet_forward.1} parent=1 // pred_check
      _
    $region35: #{addnet_forward.1} parent=1 // pred_check_branch
      %33 = sbr.rel (0) target = $region37
    $region36: #{addnet_forward.1} parent=1 // pred_region
      _
    $region37: #{addnet_forward.1} parent=1 // pred_fallthru
      _
    // Predicated region
    $region38: #{addnet_forward.1} parent=1 // pred_check
      _
    $region39: #{addnet_forward.1} parent=1 // pred_check_branch
      %35 = sbr.rel (0) target = $region41
    $region40: #{addnet_forward.1} parent=1 // pred_region
      _
    $region41: #{addnet_forward.1} parent=1 // pred_fallthru
      _
    %v36 = vld [vmem:[%s0] sm:$0xff]
    %v37 = vld [vmem:[%s0 + $0x8] sm:$0xff]
    %v38 = vld [vmem:[%s0 + $0x10] sm:$0xff]
    %v39 = vld [vmem:[%s0 + $0x18] sm:$0xff]
    %v40 = vld [vmem:[%s0 + $0x20] sm:$0xff]
    %v41 = vld [vmem:[%s0 + $0x28] sm:$0xff]
    %v42 = vld [vmem:[%s0 + $0x30] sm:$0xff]
    %v43 = vld [vmem:[%s0 + $0x38] sm:$0xff]
    %v44 = vld [vmem:[%s1] sm:$0xff]
    %v45 = vld [vmem:[%s1 + $0x8] sm:$0xff]
    %v46 = vld [vmem:[%s1 + $0x10] sm:$0xff]
    %v47 = vld [vmem:[%s1 + $0x18] sm:$0xff]
    %v48 = vld [vmem:[%s2] sm:$0x1]
    %v50 = vlaneseq
    %v51 = vshrl.u32 %v50, 7
    %v52 = vsub.s32 0, %v51
    %v53 = vrot.slane %v48, %v52
    %vm55 = vcmask 261120
    %v57 = vsel %vm55, %v36, 0
    %v60 = vsel %vm55, %v37, 0
    %v63 = vsel %vm55, %v38, 0
    %v66 = vsel %vm55, %v39, 0
    %v69 = vsel %vm55, %v40, 0
    %v72 = vsel %vm55, %v41, 0
    %v75 = vsel %vm55, %v42, 0
    %v78 = vsel %vm55, %v43, 0
    %80 = vmatprep.subr.mxu0 0.0
    %81 = vmatpush1.msra.mxu0 %v44
    %82 = vmatprep.subr.mxu0 0.0
    %83 = vmatpush1.msra.mxu0 %v45
    %84 = vmatprep.subr.mxu0 0.0
    %85 = vmatpush1.msra.mxu0 %v46
    %86 = vmatprep.subr.mxu0 0.0
    %87 = vmatpush1.msra.mxu0 %v47
    %88 = vmatprep.subr.mxu0 0.0
    %89 = vmatpush1.msra.mxu0 0.0
    %90 = vmatprep.subr.mxu0 0.0
    %91 = vmatpush1.msra.mxu0 0.0
    %92 = vmatprep.subr.mxu0 0.0
    %93 = vmatpush1.msra.mxu0 0.0
    %94 = vmatprep.subr.mxu0 0.0
    %95 = vmatpush1.msra.mxu0 0.0
    %96 = vmatprep.subr.mxu0 0.0
    %97 = vmatpush1.msra.mxu0 0.0
    %98 = vmatprep.subr.mxu0 0.0
    %99 = vmatpush1.msra.mxu0 0.0
    %100 = vmatprep.subr.mxu0 0.0
    %101 = vmatpush1.msra.mxu0 0.0
    %102 = vmatprep.subr.mxu0 0.0
    %103 = vmatpush1.msra.mxu0 0.0
    %104 = vmatprep.subr.mxu0 0.0
    %105 = vmatpush1.msra.mxu0 0.0
    %106 = vmatprep.subr.mxu0 0.0
    %107 = vmatpush1.msra.mxu0 0.0
    %108 = vmatprep.subr.mxu0 0.0
    %109 = vmatpush1.msra.mxu0 0.0
    %110 = vmatprep.subr.mxu0 0.0
    %111 = vmatpush1.msra.mxu0 0.0
    %112 = vmatprep.subr.mxu0 0.0
    %113 = vmatpush1.msra.mxu0 0.0
    %114 = vmatprep.subr.mxu0 0.0
    %115 = vmatpush1.msra.mxu0 0.0
    %116 = vmatprep.subr.mxu0 0.0
    %117 = vmatpush1.msra.mxu0 0.0
    %118 = vmatprep.subr.mxu0 0.0
    %119 = vmatpush1.msra.mxu0 0.0
    %120 = vmatprep.subr.mxu0 0.0
    %121 = vmatpush1.msra.mxu0 0.0
    %122 = vmatprep.subr.mxu0 0.0
    %123 = vmatpush1.msra.mxu0 0.0
    %124 = vmatprep.subr.mxu0 0.0
    %125 = vmatpush1.msra.mxu0 0.0
    %126 = vmatprep.subr.mxu0 0.0
    %127 = vmatpush1.msra.mxu0 0.0
    %128 = vmatprep.subr.mxu0 0.0
    %129 = vmatpush1.msra.mxu0 0.0
    %130 = vmatprep.subr.mxu0 0.0
    %131 = vmatpush1.msra.mxu0 0.0
    %132 = vmatprep.subr.mxu0 0.0
    %133 = vmatpush1.msra.mxu0 0.0
    %134 = vmatprep.subr.mxu0 0.0
    %135 = vmatpush1.msra.mxu0 0.0
    %136 = vmatprep.subr.mxu0 0.0
    %137 = vmatpush1.msra.mxu0 0.0
    %138 = vmatprep.subr.mxu0 0.0
    %139 = vmatpush1.msra.mxu0 0.0
    %140 = vmatprep.subr.mxu0 0.0
    %141 = vmatpush1.msra.mxu0 0.0
    %142 = vmatprep.subr.mxu0 0.0
    %143 = vmatpush1.msra.mxu0 0.0
    %144 = vmatprep.mubr.f32.mxu0 0.0
    %145 = vmatmul.mubr.f32.gmra.mrb[0].mxu0 %v57
    %v146 = vpop.f32.mrb[0].mxu0
    %v147 = vadd.f32 %v53, %v146
    %v148 = vpop.f32.mrb[0].mxu0
    %149 = vmatprep.mubr.f32.mxu0 0.0
    %150 = vmatmul.mubr.f32.gmra.mrb[0].mxu0 %v60
    %v151 = vpop.f32.mrb[0].mxu0
    %v152 = vadd.f32 %v53, %v151
    %v153 = vpop.f32.mrb[0].mxu0
    %154 = vmatprep.mubr.f32.mxu0 0.0
    %155 = vmatmul.mubr.f32.gmra.mrb[0].mxu0 %v63
    %v156 = vpop.f32.mrb[0].mxu0
    %v157 = vadd.f32 %v53, %v156
    %v158 = vpop.f32.mrb[0].mxu0
    %159 = vmatprep.mubr.f32.mxu0 0.0
    %160 = vmatmul.mubr.f32.gmra.mrb[0].mxu0 %v66
    %v161 = vpop.f32.mrb[0].mxu0
    %v162 = vadd.f32 %v53, %v161
    %v163 = vpop.f32.mrb[0].mxu0
    %164 = vmatprep.mubr.f32.mxu0 0.0
    %165 = vmatmul.mubr.f32.gmra.mrb[0].mxu0 %v69
    %v166 = vpop.f32.mrb[0].mxu0
    %v167 = vadd.f32 %v53, %v166
    %v168 = vpop.f32.mrb[0].mxu0
    %169 = vmatprep.mubr.f32.mxu0 0.0
    %170 = vmatmul.mubr.f32.gmra.mrb[0].mxu0 %v72
    %v171 = vpop.f32.mrb[0].mxu0
    %v172 = vadd.f32 %v53, %v171
    %v173 = vpop.f32.mrb[0].mxu0
    %174 = vmatprep.mubr.f32.mxu0 0.0
    %175 = vmatmul.mubr.f32.gmra.mrb[0].mxu0 %v75
    %v176 = vpop.f32.mrb[0].mxu0
    %v177 = vadd.f32 %v53, %v176
    %v178 = vpop.f32.mrb[0].mxu0
    %179 = vmatprep.mubr.f32.mxu0 0.0
    %180 = vmatmul.mubr.f32.gmra.mrb[0].mxu0 %v78
    %v181 = vpop.f32.mrb[0].mxu0
    %v182 = vadd.f32 %v53, %v181
    %v183 = vpop.f32.mrb[0].mxu0
    %184 = vdwg.mxu0
    %v185 = vxor.u32 %v147, 2147483648
    %v186 = vxor.u32 %v152, 2147483648
    %v187 = vxor.u32 %v157, 2147483648
    %v188 = vxor.u32 %v162, 2147483648
    %v189 = vxor.u32 %v167, 2147483648
    %v190 = vxor.u32 %v172, 2147483648
    %v191 = vxor.u32 %v177, 2147483648
    %v192 = vxor.u32 %v182, 2147483648
    %v193 = vmul.f32 %v185, 1.442695
    %v194 = vpow.pop %v193
    %v195 = vmul.f32 %v186, 1.442695
    %v196 = vpow.pop %v195
    %v197 = vmul.f32 %v187, 1.442695
    %v198 = vpow.pop %v197
    %v199 = vmul.f32 %v188, 1.442695
    %v200 = vpow.pop %v199
    %v201 = vmul.f32 %v189, 1.442695
    %v202 = vpow.pop %v201
    %v203 = vmul.f32 %v190, 1.442695
    %v204 = vpow.pop %v203
    %v205 = vmul.f32 %v191, 1.442695
    %v206 = vpow.pop %v205
    %v207 = vmul.f32 %v192, 1.442695
    %v208 = vpow.pop %v207
    %v209 = vadd.f32 %v194, 1.0
    %v210 = vadd.f32 %v196, 1.0
    %v211 = vadd.f32 %v198, 1.0
    %v212 = vadd.f32 %v200, 1.0
    %v213 = vadd.f32 %v202, 1.0
    %v214 = vadd.f32 %v204, 1.0
    %v215 = vadd.f32 %v206, 1.0
    %v216 = vadd.f32 %v208, 1.0
    %v217 = vrcp.pop %v209
    %v218 = vmul.f32 1.0, %v217
    %v219 = vrcp.pop %v210
    %v220 = vmul.f32 1.0, %v219
    %v221 = vrcp.pop %v211
    %v222 = vmul.f32 1.0, %v221
    %v223 = vrcp.pop %v212
    %v224 = vmul.f32 1.0, %v223
    %v225 = vrcp.pop %v213
    %v226 = vmul.f32 1.0, %v225
    %v227 = vrcp.pop %v214
    %v228 = vmul.f32 1.0, %v227
    %v229 = vrcp.pop %v215
    %v230 = vmul.f32 1.0, %v229
    %v231 = vrcp.pop %v216
    %v232 = vmul.f32 1.0, %v231
    %v233 = vld [vmem:[%s7] sm:$0x1]
    %v234 = vld [vmem:[%s7 + $0x1] sm:$0x1]
    %v235 = vld [vmem:[%s7 + $0x2] sm:$0x1]
    %v236 = vld [vmem:[%s7 + $0x3] sm:$0x1]
    %v237 = vlaneseq
    %v238 = vshrl.u32 %v237, 7
    %v239 = vsub.s32 0, %v238
    %v240 = vrot.slane %v233, %v239
    %242 = vrot.lane.b32.xlu0 %v240, 32
    %v243 = vpop.permute.xlu0 %242
    %vm245 = vcmp.gt.f32.partialorder %v218, %v243
    %vm246 = vcmp.gt.f32.partialorder %v220, %v243
    %vm247 = vcmp.gt.f32.partialorder %v222, %v243
    %vm248 = vcmp.gt.f32.partialorder %v224, %v243
    %vm249 = vcmp.gt.f32.partialorder %v226, %v243
    %vm250 = vcmp.gt.f32.partialorder %v228, %v243
    %vm251 = vcmp.gt.f32.partialorder %v230, %v243
    %vm252 = vcmp.gt.f32.partialorder %v232, %v243
    %v253 = vlaneseq
    %v254 = vshrl.u32 %v253, 7
    %v255 = vsub.s32 0, %v254
    %v256 = vrot.slane %v235, %v255
    %258 = vrot.lane.b32.xlu0 %v256, 32
    %v259 = vpop.permute.xlu0 %258
    %v261 = vsel %vm245, %v259, 0.0
    %v262 = vsel %vm246, %v259, 0.0
    %v263 = vsel %vm247, %v259, 0.0
    %v264 = vsel %vm248, %v259, 0.0
    %v265 = vsel %vm249, %v259, 0.0
    %v266 = vsel %vm250, %v259, 0.0
    %v267 = vsel %vm251, %v259, 0.0
    %v268 = vsel %vm252, %v259, 0.0
    %v269 = vld [vmem:[%s5] sm:$0xff]
    %v270 = vld [vmem:[%s5 + $0x8] sm:$0xff]
    %v271 = vld [vmem:[%s5 + $0x10] sm:$0xff]
    %v272 = vld [vmem:[%s5 + $0x18] sm:$0xff]
    %v273 = vld [vmem:[%s6] sm:$0x1]
    %v275 = vlaneseq
    %v276 = vshrl.u32 %v275, 7
    %v277 = vsub.s32 0, %v276
    %v278 = vrot.slane %v273, %v277
    %288 = vrot.lane.b32.xlu0 %v218, 96
    %v289 = vpop.permute.xlu0 %288
    %290 = vrot.lane.b32.xlu0 %v220, 96
    %v291 = vpop.permute.xlu0 %290
    %292 = vrot.lane.b32.xlu0 %v222, 96
    %v293 = vpop.permute.xlu0 %292
    %294 = vrot.lane.b32.xlu0 %v224, 96
    %v295 = vpop.permute.xlu0 %294
    %296 = vrot.lane.b32.xlu0 %v226, 96
    %v297 = vpop.permute.xlu0 %296
    %298 = vrot.lane.b32.xlu0 %v228, 96
    %v299 = vpop.permute.xlu0 %298
    %300 = vrot.lane.b32.xlu0 %v230, 96
    %v301 = vpop.permute.xlu0 %300
    %302 = vrot.lane.b32.xlu0 %v232, 96
    %v303 = vpop.permute.xlu0 %302
    %v304 = vsel %vm55, %v289, 0
    %v306 = vsel %vm55, %v291, 0
    %v308 = vsel %vm55, %v293, 0
    %v310 = vsel %vm55, %v295, 0
    %v312 = vsel %vm55, %v297, 0
    %v314 = vsel %vm55, %v299, 0
    %v316 = vsel %vm55, %v301, 0
    %v318 = vsel %vm55, %v303, 0
    %320 = vmatprep.subr.mxu0 0.0
    %321 = vmatpush1.msra.mxu0 %v269
    %322 = vmatprep.subr.mxu0 0.0
    %323 = vmatpush1.msra.mxu0 %v270
    %324 = vmatprep.subr.mxu0 0.0
    %325 = vmatpush1.msra.mxu0 %v271
    %326 = vmatprep.subr.mxu0 0.0
    %327 = vmatpush1.msra.mxu0 %v272
    %328 = vmatprep.subr.mxu0 0.0
    %329 = vmatpush1.msra.mxu0 0.0
    %330 = vmatprep.subr.mxu0 0.0
    %331 = vmatpush1.msra.mxu0 0.0
    %332 = vmatprep.subr.mxu0 0.0
    %333 = vmatpush1.msra.mxu0 0.0
    %334 = vmatprep.subr.mxu0 0.0
    %335 = vmatpush1.msra.mxu0 0.0
    %336 = vmatprep.subr.mxu0 0.0
    %337 = vmatpush1.msra.mxu0 0.0
    %338 = vmatprep.subr.mxu0 0.0
    %339 = vmatpush1.msra.mxu0 0.0
    %340 = vmatprep.subr.mxu0 0.0
    %341 = vmatpush1.msra.mxu0 0.0
    %342 = vmatprep.subr.mxu0 0.0
    %343 = vmatpush1.msra.mxu0 0.0
    %344 = vmatprep.subr.mxu0 0.0
    %345 = vmatpush1.msra.mxu0 0.0
    %346 = vmatprep.subr.mxu0 0.0
    %347 = vmatpush1.msra.mxu0 0.0
    %348 = vmatprep.subr.mxu0 0.0
    %349 = vmatpush1.msra.mxu0 0.0
    %350 = vmatprep.subr.mxu0 0.0
    %351 = vmatpush1.msra.mxu0 0.0
    %352 = vmatprep.subr.mxu0 0.0
    %353 = vmatpush1.msra.mxu0 0.0
    %354 = vmatprep.subr.mxu0 0.0
    %355 = vmatpush1.msra.mxu0 0.0
    %356 = vmatprep.subr.mxu0 0.0
    %357 = vmatpush1.msra.mxu0 0.0
    %358 = vmatprep.subr.mxu0 0.0
    %359 = vmatpush1.msra.mxu0 0.0
    %360 = vmatprep.subr.mxu0 0.0
    %361 = vmatpush1.msra.mxu0 0.0
    %362 = vmatprep.subr.mxu0 0.0
    %363 = vmatpush1.msra.mxu0 0.0
    %364 = vmatprep.subr.mxu0 0.0
    %365 = vmatpush1.msra.mxu0 0.0
    %366 = vmatprep.subr.mxu0 0.0
    %367 = vmatpush1.msra.mxu0 0.0
    %368 = vmatprep.subr.mxu0 0.0
    %369 = vmatpush1.msra.mxu0 0.0
    %370 = vmatprep.subr.mxu0 0.0
    %371 = vmatpush1.msra.mxu0 0.0
    %372 = vmatprep.subr.mxu0 0.0
    %373 = vmatpush1.msra.mxu0 0.0
    %374 = vmatprep.subr.mxu0 0.0
    %375 = vmatpush1.msra.mxu0 0.0
    %376 = vmatprep.subr.mxu0 0.0
    %377 = vmatpush1.msra.mxu0 0.0
    %378 = vmatprep.subr.mxu0 0.0
    %379 = vmatpush1.msra.mxu0 0.0
    %380 = vmatprep.subr.mxu0 0.0
    %381 = vmatpush1.msra.mxu0 0.0
    %382 = vmatprep.subr.mxu0 0.0
    %383 = vmatpush1.msra.mxu0 0.0
    %384 = vmatprep.mubr.f32.mxu0 0.0
    %385 = vmatmul.mubr.f32.gmra.mrb[0].mxu0 %v304
    %v386 = vpop.f32.mrb[0].mxu0
    %v387 = vadd.f32 %v278, %v386
    %v388 = vpop.f32.mrb[0].mxu0
    %389 = vmatprep.mubr.f32.mxu0 0.0
    %390 = vmatmul.mubr.f32.gmra.mrb[0].mxu0 %v306
    %v391 = vpop.f32.mrb[0].mxu0
    %v392 = vadd.f32 %v278, %v391
    %v393 = vpop.f32.mrb[0].mxu0
    %394 = vmatprep.mubr.f32.mxu0 0.0
    %395 = vmatmul.mubr.f32.gmra.mrb[0].mxu0 %v308
    %v396 = vpop.f32.mrb[0].mxu0
    %v397 = vadd.f32 %v278, %v396
    %v398 = vpop.f32.mrb[0].mxu0
    %399 = vmatprep.mubr.f32.mxu0 0.0
    %400 = vmatmul.mubr.f32.gmra.mrb[0].mxu0 %v310
    %v401 = vpop.f32.mrb[0].mxu0
    %v402 = vadd.f32 %v278, %v401
    %v403 = vpop.f32.mrb[0].mxu0
    %404 = vmatprep.mubr.f32.mxu0 0.0
    %405 = vmatmul.mubr.f32.gmra.mrb[0].mxu0 %v312
    %v406 = vpop.f32.mrb[0].mxu0
    %v407 = vadd.f32 %v278, %v406
    %v408 = vpop.f32.mrb[0].mxu0
    %409 = vmatprep.mubr.f32.mxu0 0.0
    %410 = vmatmul.mubr.f32.gmra.mrb[0].mxu0 %v314
    %v411 = vpop.f32.mrb[0].mxu0
    %v412 = vadd.f32 %v278, %v411
    %v413 = vpop.f32.mrb[0].mxu0
    %414 = vmatprep.mubr.f32.mxu0 0.0
    %415 = vmatmul.mubr.f32.gmra.mrb[0].mxu0 %v316
    %v416 = vpop.f32.mrb[0].mxu0
    %v417 = vadd.f32 %v278, %v416
    %v418 = vpop.f32.mrb[0].mxu0
    %419 = vmatprep.mubr.f32.mxu0 0.0
    %420 = vmatmul.mubr.f32.gmra.mrb[0].mxu0 %v318
    %v421 = vpop.f32.mrb[0].mxu0
    %v422 = vadd.f32 %v278, %v421
    %v423 = vpop.f32.mrb[0].mxu0
    %424 = vdwg.mxu0
    %v425 = vxor.u32 %v387, 2147483648
    %v426 = vxor.u32 %v392, 2147483648
    %v427 = vxor.u32 %v397, 2147483648
    %v428 = vxor.u32 %v402, 2147483648
    %v429 = vxor.u32 %v407, 2147483648
    %v430 = vxor.u32 %v412, 2147483648
    %v431 = vxor.u32 %v417, 2147483648
    %v432 = vxor.u32 %v422, 2147483648
    %v433 = vmul.f32 %v425, 1.442695
    %v434 = vpow.pop %v433
    %v435 = vmul.f32 %v426, 1.442695
    %v436 = vpow.pop %v435
    %v437 = vmul.f32 %v427, 1.442695
    %v438 = vpow.pop %v437
    %v439 = vmul.f32 %v428, 1.442695
    %v440 = vpow.pop %v439
    %v441 = vmul.f32 %v429, 1.442695
    %v442 = vpow.pop %v441
    %v443 = vmul.f32 %v430, 1.442695
    %v444 = vpow.pop %v443
    %v445 = vmul.f32 %v431, 1.442695
    %v446 = vpow.pop %v445
    %v447 = vmul.f32 %v432, 1.442695
    %v448 = vpow.pop %v447
    %v449 = vadd.f32 %v434, 1.0
    %v450 = vadd.f32 %v436, 1.0
    %v451 = vadd.f32 %v438, 1.0
    %v452 = vadd.f32 %v440, 1.0
    %v453 = vadd.f32 %v442, 1.0
    %v454 = vadd.f32 %v444, 1.0
    %v455 = vadd.f32 %v446, 1.0
    %v456 = vadd.f32 %v448, 1.0
    %v457 = vrcp.pop %v449
    %v458 = vmul.f32 1.0, %v457
    %v459 = vrcp.pop %v450
    %v460 = vmul.f32 1.0, %v459
    %v461 = vrcp.pop %v451
    %v462 = vmul.f32 1.0, %v461
    %v463 = vrcp.pop %v452
    %v464 = vmul.f32 1.0, %v463
    %v465 = vrcp.pop %v453
    %v466 = vmul.f32 1.0, %v465
    %v467 = vrcp.pop %v454
    %v468 = vmul.f32 1.0, %v467
    %v469 = vrcp.pop %v455
    %v470 = vmul.f32 1.0, %v469
    %v471 = vrcp.pop %v456
    %v472 = vmul.f32 1.0, %v471
    %v473 = vlaneseq
    %v474 = vshrl.u32 %v473, 7
    %v475 = vsub.s32 0, %v474
    %v476 = vrot.slane %v234, %v475
    %vm477 = vcmp.gt.f32.partialorder %v458, %v476
    %vm478 = vcmp.gt.f32.partialorder %v460, %v476
    %vm479 = vcmp.gt.f32.partialorder %v462, %v476
    %vm480 = vcmp.gt.f32.partialorder %v464, %v476
    %vm481 = vcmp.gt.f32.partialorder %v466, %v476
    %vm482 = vcmp.gt.f32.partialorder %v468, %v476
    %vm483 = vcmp.gt.f32.partialorder %v470, %v476
    %vm484 = vcmp.gt.f32.partialorder %v472, %v476
    %v485 = vlaneseq
    %v486 = vshrl.u32 %v485, 7
    %v487 = vsub.s32 0, %v486
    %v488 = vrot.slane %v236, %v487
    %v489 = vsel %vm477, %v488, 0.0
    %v490 = vsel %vm478, %v488, 0.0
    %v491 = vsel %vm479, %v488, 0.0
    %v492 = vsel %vm480, %v488, 0.0
    %v493 = vsel %vm481, %v488, 0.0
    %v494 = vsel %vm482, %v488, 0.0
    %v495 = vsel %vm483, %v488, 0.0
    %v496 = vsel %vm484, %v488, 0.0
    %497 = vst.msk [vmem:[#allocation2] sm:$0xff] %vm55, %v147
    %498 = vst.msk [vmem:[#allocation2 + $0x8] sm:$0xff] %vm55, %v152
    %499 = vst.msk [vmem:[#allocation2 + $0x10] sm:$0xff] %vm55, %v157
    %500 = vst.msk [vmem:[#allocation2 + $0x18] sm:$0xff] %vm55, %v162
    %501 = vst.msk [vmem:[#allocation2 + $0x20] sm:$0xff] %vm55, %v167
    %502 = vst.msk [vmem:[#allocation2 + $0x28] sm:$0xff] %vm55, %v172
    %503 = vst.msk [vmem:[#allocation2 + $0x30] sm:$0xff] %vm55, %v177
    %504 = vst.msk [vmem:[#allocation2 + $0x38] sm:$0xff] %vm55, %v182
    %513 = vrot.lane.b32.xlu0 %v261, 96
    %v514 = vpop.permute.xlu0 %513
    %515 = vrot.lane.b32.xlu0 %v262, 96
    %v516 = vpop.permute.xlu0 %515
    %517 = vrot.lane.b32.xlu0 %v263, 96
    %v518 = vpop.permute.xlu0 %517
    %519 = vrot.lane.b32.xlu0 %v264, 96
    %v520 = vpop.permute.xlu0 %519
    %521 = vrot.lane.b32.xlu0 %v265, 96
    %v522 = vpop.permute.xlu0 %521
    %523 = vrot.lane.b32.xlu0 %v266, 96
    %v524 = vpop.permute.xlu0 %523
    %525 = vrot.lane.b32.xlu0 %v267, 96
    %v526 = vpop.permute.xlu0 %525
    %527 = vrot.lane.b32.xlu0 %v268, 96
    %v528 = vpop.permute.xlu0 %527
    %537 = vst.msk [vmem:[#allocation3] sm:$0xff] %vm55, %v514
    %538 = vst.msk [vmem:[#allocation3 + $0x8] sm:$0xff] %vm55, %v516
    %539 = vst.msk [vmem:[#allocation3 + $0x10] sm:$0xff] %vm55, %v518
    %540 = vst.msk [vmem:[#allocation3 + $0x18] sm:$0xff] %vm55, %v520
    %541 = vst.msk [vmem:[#allocation3 + $0x20] sm:$0xff] %vm55, %v522
    %542 = vst.msk [vmem:[#allocation3 + $0x28] sm:$0xff] %vm55, %v524
    %543 = vst.msk [vmem:[#allocation3 + $0x30] sm:$0xff] %vm55, %v526
    %544 = vst.msk [vmem:[#allocation3 + $0x38] sm:$0xff] %vm55, %v528
    %545 = vst.msk [vmem:[#allocation6] sm:$0xff] %vm55, %v489
    %546 = vst.msk [vmem:[#allocation6 + $0x8] sm:$0xff] %vm55, %v490
    %547 = vst.msk [vmem:[#allocation6 + $0x10] sm:$0xff] %vm55, %v491
    %548 = vst.msk [vmem:[#allocation6 + $0x18] sm:$0xff] %vm55, %v492
    %549 = vst.msk [vmem:[#allocation6 + $0x20] sm:$0xff] %vm55, %v493
    %550 = vst.msk [vmem:[#allocation6 + $0x28] sm:$0xff] %vm55, %v494
    %551 = vst.msk [vmem:[#allocation6 + $0x30] sm:$0xff] %vm55, %v495
    %552 = vst.msk [vmem:[#allocation6 + $0x38] sm:$0xff] %vm55, %v496
    %v553 = vld [vmem:[#allocation3] sm:$0xff]
    %v554 = vmul.f32 %v553, 0.0
    %v555 = vld [vmem:[#allocation2] sm:$0xff]
    %v556 = vadd.f32 %v554, %v555
    %557 = vst.msk [vmem:[#allocation4] sm:$0xff] %vm55, %v556
    %s558 = scalar_lea.vmem [#allocation3], 8
    %v559 = vld [vmem:[%s558] sm:$0xff]
    %v560 = vmul.f32 %v559, %v556
    %s561 = scalar_lea.vmem [#allocation2], 8
    %v562 = vld [vmem:[%s561] sm:$0xff]
    %v563 = vadd.f32 %v560, %v562
    %s564 = scalar_lea.vmem [#allocation4], 8
    %565 = vst.msk [vmem:[%s564] sm:$0xff] %vm55, %v563
    %s566 = scalar_lea.vmem [#allocation3], 16
    %v567 = vld [vmem:[%s566] sm:$0xff]
    %v568 = vmul.f32 %v567, %v563
    %s569 = scalar_lea.vmem [#allocation2], 16
    %v570 = vld [vmem:[%s569] sm:$0xff]
    %v571 = vadd.f32 %v568, %v570
    %s572 = scalar_lea.vmem [#allocation4], 16
    %573 = vst.msk [vmem:[%s572] sm:$0xff] %vm55, %v571
    %s574 = scalar_lea.vmem [#allocation3], 24
    %v575 = vld [vmem:[%s574] sm:$0xff]
    %v576 = vmul.f32 %v575, %v571
    %s577 = scalar_lea.vmem [#allocation2], 24
    %v578 = vld [vmem:[%s577] sm:$0xff]
    %v579 = vadd.f32 %v576, %v578
    %s580 = scalar_lea.vmem [#allocation4], 24
    %581 = vst.msk [vmem:[%s580] sm:$0xff] %vm55, %v579
    %s582 = scalar_lea.vmem [#allocation3], 32
    %v583 = vld [vmem:[%s582] sm:$0xff]
    %v584 = vmul.f32 %v583, %v579
    %s585 = scalar_lea.vmem [#allocation2], 32
    %v586 = vld [vmem:[%s585] sm:$0xff]
    %v587 = vadd.f32 %v584, %v586
    %s588 = scalar_lea.vmem [#allocation4], 32
    %589 = vst.msk [vmem:[%s588] sm:$0xff] %vm55, %v587
    %s590 = scalar_lea.vmem [#allocation3], 40
    %v591 = vld [vmem:[%s590] sm:$0xff]
    %v592 = vmul.f32 %v591, %v587
    %s593 = scalar_lea.vmem [#allocation2], 40
    %v594 = vld [vmem:[%s593] sm:$0xff]
    %v595 = vadd.f32 %v592, %v594
    %s596 = scalar_lea.vmem [#allocation4], 40
    %597 = vst.msk [vmem:[%s596] sm:$0xff] %vm55, %v595
    %s598 = scalar_lea.vmem [#allocation3], 48
    %v599 = vld [vmem:[%s598] sm:$0xff]
    %v600 = vmul.f32 %v599, %v595
    %s601 = scalar_lea.vmem [#allocation2], 48
    %v602 = vld [vmem:[%s601] sm:$0xff]
    %v603 = vadd.f32 %v600, %v602
    %s604 = scalar_lea.vmem [#allocation4], 48
    %605 = vst.msk [vmem:[%s604] sm:$0xff] %vm55, %v603
    %s606 = scalar_lea.vmem [#allocation3], 56
    %v607 = vld [vmem:[%s606] sm:$0xff]
    %v608 = vmul.f32 %v607, %v603
    %s609 = scalar_lea.vmem [#allocation2], 56
    %v610 = vld [vmem:[%s609] sm:$0xff]
    %v611 = vadd.f32 %v608, %v610
    %s612 = scalar_lea.vmem [#allocation4], 56
    %613 = vst.msk [vmem:[%s612] sm:$0xff] %vm55, %v611
    %v614 = vld [vmem:[#allocation4] sm:$0xff]
    %v615 = vld [vmem:[#allocation4 + $0x8] sm:$0xff]
    %v616 = vld [vmem:[#allocation4 + $0x10] sm:$0xff]
    %v617 = vld [vmem:[#allocation4 + $0x18] sm:$0xff]
    %v618 = vld [vmem:[#allocation4 + $0x20] sm:$0xff]
    %v619 = vld [vmem:[#allocation4 + $0x28] sm:$0xff]
    %v620 = vld [vmem:[#allocation4 + $0x30] sm:$0xff]
    %v621 = vld [vmem:[#allocation4 + $0x38] sm:$0xff]
    %v622 = vtanh.pop %v614
    %v623 = vtanh.pop %v615
    %v624 = vtanh.pop %v616
    %v625 = vtanh.pop %v617
    %v626 = vtanh.pop %v618
    %v627 = vtanh.pop %v619
    %v628 = vtanh.pop %v620
    %v629 = vtanh.pop %v621
    %v630 = vld [vmem:[%s3] sm:$0xff]
    %v631 = vld [vmem:[%s3 + $0x8] sm:$0xff]
    %v632 = vld [vmem:[%s3 + $0x10] sm:$0xff]
    %v633 = vld [vmem:[%s3 + $0x18] sm:$0xff]
    %v634 = vld [vmem:[%s4] sm:$0x1]
    %v636 = vlaneseq
    %v637 = vshrl.u32 %v636, 7
    %v638 = vsub.s32 0, %v637
    %v639 = vrot.slane %v634, %v638
    %v642 = vsel %vm55, %v622, 0
    %v645 = vsel %vm55, %v623, 0
    %v648 = vsel %vm55, %v624, 0
    %v651 = vsel %vm55, %v625, 0
    %v654 = vsel %vm55, %v626, 0
    %v657 = vsel %vm55, %v627, 0
    %v660 = vsel %vm55, %v628, 0
    %v663 = vsel %vm55, %v629, 0
    %665 = vmatprep.subr.mxu0 0.0
    %666 = vmatpush1.msra.mxu0 %v630
    %667 = vmatprep.subr.mxu0 0.0
    %668 = vmatpush1.msra.mxu0 %v631
    %669 = vmatprep.subr.mxu0 0.0
    %670 = vmatpush1.msra.mxu0 %v632
    %671 = vmatprep.subr.mxu0 0.0
    %672 = vmatpush1.msra.mxu0 %v633
    %673 = vmatprep.subr.mxu0 0.0
    %674 = vmatpush1.msra.mxu0 0.0
    %675 = vmatprep.subr.mxu0 0.0
    %676 = vmatpush1.msra.mxu0 0.0
    %677 = vmatprep.subr.mxu0 0.0
    %678 = vmatpush1.msra.mxu0 0.0
    %679 = vmatprep.subr.mxu0 0.0
    %680 = vmatpush1.msra.mxu0 0.0
    %681 = vmatprep.subr.mxu0 0.0
    %682 = vmatpush1.msra.mxu0 0.0
    %683 = vmatprep.subr.mxu0 0.0
    %684 = vmatpush1.msra.mxu0 0.0
    %685 = vmatprep.subr.mxu0 0.0
    %686 = vmatpush1.msra.mxu0 0.0
    %687 = vmatprep.subr.mxu0 0.0
    %688 = vmatpush1.msra.mxu0 0.0
    %689 = vmatprep.subr.mxu0 0.0
    %690 = vmatpush1.msra.mxu0 0.0
    %691 = vmatprep.subr.mxu0 0.0
    %692 = vmatpush1.msra.mxu0 0.0
    %693 = vmatprep.subr.mxu0 0.0
    %694 = vmatpush1.msra.mxu0 0.0
    %695 = vmatprep.subr.mxu0 0.0
    %696 = vmatpush1.msra.mxu0 0.0
    %697 = vmatprep.subr.mxu0 0.0
    %698 = vmatpush1.msra.mxu0 0.0
    %699 = vmatprep.subr.mxu0 0.0
    %700 = vmatpush1.msra.mxu0 0.0
    %701 = vmatprep.subr.mxu0 0.0
    %702 = vmatpush1.msra.mxu0 0.0
    %703 = vmatprep.subr.mxu0 0.0
    %704 = vmatpush1.msra.mxu0 0.0
    %705 = vmatprep.subr.mxu0 0.0
    %706 = vmatpush1.msra.mxu0 0.0
    %707 = vmatprep.subr.mxu0 0.0
    %708 = vmatpush1.msra.mxu0 0.0
    %709 = vmatprep.subr.mxu0 0.0
    %710 = vmatpush1.msra.mxu0 0.0
    %711 = vmatprep.subr.mxu0 0.0
    %712 = vmatpush1.msra.mxu0 0.0
    %713 = vmatprep.subr.mxu0 0.0
    %714 = vmatpush1.msra.mxu0 0.0
    %715 = vmatprep.subr.mxu0 0.0
    %716 = vmatpush1.msra.mxu0 0.0
    %717 = vmatprep.subr.mxu0 0.0
    %718 = vmatpush1.msra.mxu0 0.0
    %719 = vmatprep.subr.mxu0 0.0
    %720 = vmatpush1.msra.mxu0 0.0
    %721 = vmatprep.subr.mxu0 0.0
    %722 = vmatpush1.msra.mxu0 0.0
    %723 = vmatprep.subr.mxu0 0.0
    %724 = vmatpush1.msra.mxu0 0.0
    %725 = vmatprep.subr.mxu0 0.0
    %726 = vmatpush1.msra.mxu0 0.0
    %727 = vmatprep.subr.mxu0 0.0
    %728 = vmatpush1.msra.mxu0 0.0
    %729 = vmatprep.mubr.f32.mxu0 0.0
    %730 = vmatmul.mubr.f32.gmra.mrb[0].mxu0 %v642
    %v731 = vpop.f32.mrb[0].mxu0
    %v732 = vadd.f32 %v639, %v731
    %v733 = vpop.f32.mrb[0].mxu0
    %734 = vmatprep.mubr.f32.mxu0 0.0
    %735 = vmatmul.mubr.f32.gmra.mrb[0].mxu0 %v645
    %v736 = vpop.f32.mrb[0].mxu0
    %v737 = vadd.f32 %v639, %v736
    %v738 = vpop.f32.mrb[0].mxu0
    %739 = vmatprep.mubr.f32.mxu0 0.0
    %740 = vmatmul.mubr.f32.gmra.mrb[0].mxu0 %v648
    %v741 = vpop.f32.mrb[0].mxu0
    %v742 = vadd.f32 %v639, %v741
    %v743 = vpop.f32.mrb[0].mxu0
    %744 = vmatprep.mubr.f32.mxu0 0.0
    %745 = vmatmul.mubr.f32.gmra.mrb[0].mxu0 %v651
    %v746 = vpop.f32.mrb[0].mxu0
    %v747 = vadd.f32 %v639, %v746
    %v748 = vpop.f32.mrb[0].mxu0
    %749 = vmatprep.mubr.f32.mxu0 0.0
    %750 = vmatmul.mubr.f32.gmra.mrb[0].mxu0 %v654
    %v751 = vpop.f32.mrb[0].mxu0
    %v752 = vadd.f32 %v639, %v751
    %v753 = vpop.f32.mrb[0].mxu0
    %754 = vmatprep.mubr.f32.mxu0 0.0
    %755 = vmatmul.mubr.f32.gmra.mrb[0].mxu0 %v657
    %v756 = vpop.f32.mrb[0].mxu0
    %v757 = vadd.f32 %v639, %v756
    %v758 = vpop.f32.mrb[0].mxu0
    %759 = vmatprep.mubr.f32.mxu0 0.0
    %760 = vmatmul.mubr.f32.gmra.mrb[0].mxu0 %v660
    %v761 = vpop.f32.mrb[0].mxu0
    %v762 = vadd.f32 %v639, %v761
    %v763 = vpop.f32.mrb[0].mxu0
    %764 = vmatprep.mubr.f32.mxu0 0.0
    %765 = vmatmul.mubr.f32.gmra.mrb[0].mxu0 %v663
    %v766 = vpop.f32.mrb[0].mxu0
    %v767 = vadd.f32 %v639, %v766
    %v768 = vpop.f32.mrb[0].mxu0
    %769 = vdwg.mxu0
    %770 = vst.msk [vmem:[#allocation5] sm:$0xff] %vm55, %v732
    %771 = vst.msk [vmem:[#allocation5 + $0x8] sm:$0xff] %vm55, %v737
    %772 = vst.msk [vmem:[#allocation5 + $0x10] sm:$0xff] %vm55, %v742
    %773 = vst.msk [vmem:[#allocation5 + $0x18] sm:$0xff] %vm55, %v747
    %774 = vst.msk [vmem:[#allocation5 + $0x20] sm:$0xff] %vm55, %v752
    %775 = vst.msk [vmem:[#allocation5 + $0x28] sm:$0xff] %vm55, %v757
    %776 = vst.msk [vmem:[#allocation5 + $0x30] sm:$0xff] %vm55, %v762
    %777 = vst.msk [vmem:[#allocation5 + $0x38] sm:$0xff] %vm55, %v767
    %v778 = vld [vmem:[#allocation6] sm:$0xff]
    %v779 = vmul.f32 %v778, 0.0
    %v780 = vld [vmem:[#allocation5] sm:$0xff]
    %v781 = vadd.f32 %v779, %v780
    %s782 = scalar_lea.vmem [#allocation6], 8
    %v783 = vld [vmem:[%s782] sm:$0xff]
    %v784 = vmul.f32 %v783, %v781
    %s785 = scalar_lea.vmem [#allocation5], 8
    %v786 = vld [vmem:[%s785] sm:$0xff]
    %v787 = vadd.f32 %v784, %v786
    %s788 = scalar_lea.vmem [#allocation6], 16
    %v789 = vld [vmem:[%s788] sm:$0xff]
    %v790 = vmul.f32 %v789, %v787
    %s791 = scalar_lea.vmem [#allocation5], 16
    %v792 = vld [vmem:[%s791] sm:$0xff]
    %v793 = vadd.f32 %v790, %v792
    %s794 = scalar_lea.vmem [#allocation6], 24
    %v795 = vld [vmem:[%s794] sm:$0xff]
    %v796 = vmul.f32 %v795, %v793
    %s797 = scalar_lea.vmem [#allocation5], 24
    %v798 = vld [vmem:[%s797] sm:$0xff]
    %v799 = vadd.f32 %v796, %v798
    %s800 = scalar_lea.vmem [#allocation6], 32
    %v801 = vld [vmem:[%s800] sm:$0xff]
    %v802 = vmul.f32 %v801, %v799
    %s803 = scalar_lea.vmem [#allocation5], 32
    %v804 = vld [vmem:[%s803] sm:$0xff]
    %v805 = vadd.f32 %v802, %v804
    %s806 = scalar_lea.vmem [#allocation6], 40
    %v807 = vld [vmem:[%s806] sm:$0xff]
    %v808 = vmul.f32 %v807, %v805
    %s809 = scalar_lea.vmem [#allocation5], 40
    %v810 = vld [vmem:[%s809] sm:$0xff]
    %v811 = vadd.f32 %v808, %v810
    %s812 = scalar_lea.vmem [#allocation6], 48
    %v813 = vld [vmem:[%s812] sm:$0xff]
    %v814 = vmul.f32 %v813, %v811
    %s815 = scalar_lea.vmem [#allocation5], 48
    %v816 = vld [vmem:[%s815] sm:$0xff]
    %v817 = vadd.f32 %v814, %v816
    %s818 = scalar_lea.vmem [#allocation6], 56
    %v819 = vld [vmem:[%s818] sm:$0xff]
    %v820 = vmul.f32 %v819, %v817
    %s821 = scalar_lea.vmem [#allocation5], 56
    %v822 = vld [vmem:[%s821] sm:$0xff]
    %v823 = vadd.f32 %v820, %v822
    %v824 = vtanh.pop %v823
    %v825 = vld [vmem:[%s8] sm:$0xff]
    %v826 = vld [vmem:[%s8 + $0x8] sm:$0xff]
    %v827 = vld [vmem:[%s8 + $0x10] sm:$0xff]
    %v828 = vld [vmem:[%s8 + $0x18] sm:$0xff]
    %v829 = vld [vmem:[%s9] sm:$0x1]
    %v831 = vlaneseq
    %v832 = vshrl.u32 %v831, 7
    %v833 = vsub.s32 0, %v832
    %v834 = vrot.slane %v829, %v833
    %v837 = vsel %vm55, %v824, 0
    %839 = vmatprep.subr.mxu0 0.0
    %840 = vmatpush1.msra.mxu0 %v825
    %841 = vmatprep.subr.mxu0 0.0
    %842 = vmatpush1.msra.mxu0 %v826
    %843 = vmatprep.subr.mxu0 0.0
    %844 = vmatpush1.msra.mxu0 %v827
    %845 = vmatprep.subr.mxu0 0.0
    %846 = vmatpush1.msra.mxu0 %v828
    %847 = vmatprep.subr.mxu0 0.0
    %848 = vmatpush1.msra.mxu0 0.0
    %849 = vmatprep.subr.mxu0 0.0
    %850 = vmatpush1.msra.mxu0 0.0
    %851 = vmatprep.subr.mxu0 0.0
    %852 = vmatpush1.msra.mxu0 0.0
    %853 = vmatprep.subr.mxu0 0.0
    %854 = vmatpush1.msra.mxu0 0.0
    %855 = vmatprep.subr.mxu0 0.0
    %856 = vmatpush1.msra.mxu0 0.0
    %857 = vmatprep.subr.mxu0 0.0
    %858 = vmatpush1.msra.mxu0 0.0
    %859 = vmatprep.subr.mxu0 0.0
    %860 = vmatpush1.msra.mxu0 0.0
    %861 = vmatprep.subr.mxu0 0.0
    %862 = vmatpush1.msra.mxu0 0.0
    %863 = vmatprep.subr.mxu0 0.0
    %864 = vmatpush1.msra.mxu0 0.0
    %865 = vmatprep.subr.mxu0 0.0
    %866 = vmatpush1.msra.mxu0 0.0
    %867 = vmatprep.subr.mxu0 0.0
    %868 = vmatpush1.msra.mxu0 0.0
    %869 = vmatprep.subr.mxu0 0.0
    %870 = vmatpush1.msra.mxu0 0.0
    %871 = vmatprep.subr.mxu0 0.0
    %872 = vmatpush1.msra.mxu0 0.0
    %873 = vmatprep.subr.mxu0 0.0
    %874 = vmatpush1.msra.mxu0 0.0
    %875 = vmatprep.subr.mxu0 0.0
    %876 = vmatpush1.msra.mxu0 0.0
    %877 = vmatprep.subr.mxu0 0.0
    %878 = vmatpush1.msra.mxu0 0.0
    %879 = vmatprep.subr.mxu0 0.0
    %880 = vmatpush1.msra.mxu0 0.0
    %881 = vmatprep.subr.mxu0 0.0
    %882 = vmatpush1.msra.mxu0 0.0
    %883 = vmatprep.subr.mxu0 0.0
    %884 = vmatpush1.msra.mxu0 0.0
    %885 = vmatprep.subr.mxu0 0.0
    %886 = vmatpush1.msra.mxu0 0.0
    %887 = vmatprep.subr.mxu0 0.0
    %888 = vmatpush1.msra.mxu0 0.0
    %889 = vmatprep.subr.mxu0 0.0
    %890 = vmatpush1.msra.mxu0 0.0
    %891 = vmatprep.subr.mxu0 0.0
    %892 = vmatpush1.msra.mxu0 0.0
    %893 = vmatprep.subr.mxu0 0.0
    %894 = vmatpush1.msra.mxu0 0.0
    %895 = vmatprep.subr.mxu0 0.0
    %896 = vmatpush1.msra.mxu0 0.0
    %897 = vmatprep.subr.mxu0 0.0
    %898 = vmatpush1.msra.mxu0 0.0
    %899 = vmatprep.subr.mxu0 0.0
    %900 = vmatpush1.msra.mxu0 0.0
    %901 = vmatprep.subr.mxu0 0.0
    %902 = vmatpush1.msra.mxu0 0.0
    %903 = vmatprep.mubr.f32.mxu0 0.0
    %904 = vmatmul.mubr.f32.gmra.mrb[0].mxu0 %v837
    %v905 = vpop.f32.mrb[0].mxu0
    %v906 = vadd.f32 %v834, %v905
    %v907 = vpop.f32.mrb[0].mxu0
    %908 = vdwg.mxu0
    %vm909 = vcmask 130048
    %910 = vst.msk [vmem:[#allocation7] sm:$0xff] %vm909, %v906
    // Predicated region
    $region42: #{addnet_forward.1} parent=1 // pred_check
      _
    $region43: #{addnet_forward.1} parent=1 // pred_check_branch
      %912 = sbr.rel (0) target = $region45
    $region44: #{addnet_forward.1} parent=1 // pred_region
      %s914 = ssub.s32 128, 128
      %915 = vsyncadd [#allocation8], %s914
      %s917 = sshll.u32 [#allocation7], 4
      %s918 = int_to_ptr.vmem [resolvable:$true] %s917
      %920 = dma.vmem_to_hbm [thread:$0]  %s918, 128, %s10, [#allocation8]
    $region45: #{addnet_forward.1} parent=1 // pred_fallthru
      _
    // Predicated region
    $region46: #{addnet_forward.1} parent=1 // pred_check
      _
    $region47: #{addnet_forward.1} parent=1 // pred_check_branch
      %922 = sbr.rel (0) target = $region49
    $region48: #{addnet_forward.1} parent=1 // pred_region
      %923 = dma.done [#allocation8], 128
    $region49: #{addnet_forward.1} parent=1 // pred_fallthru
      _
    %924 = vsyncpa [#allocation8], 1

</llo_original>
